<compile_context>
chip_gen: v7x
topology: tpu7x:2x2x1
jax: 0.10.0
libtpu: 0.0.40
codegen_flags: <defaults>
</compile_context>

<pallas_src>
import jax
import jax.numpy as jnp
from jax.experimental import pallas as pl
from jax.experimental.pallas import tpu as pltpu


def _round_up(x: int, m: int) -> int:
    return ((x + m - 1) // m) * m


def _prediction_kernel(x_ref, w_ref, b_ref, o_ref, m_sc, l_sc):
    # x_ref: (tile_m, D)  matmul dtype (bf16 by default)
    # w_ref: (D, tile_v)  matmul dtype
    # b_ref: (1, tile_v)  f32
    # o_ref: (tile_m, V_pad) -- resident across the vocab grid axis
    # m_sc, l_sc: (tile_m, 1) f32 running max / running sum scratch
    j = pl.program_id(1)
    num_v = pl.num_programs(1)

    @pl.when(j == 0)
    def _init():
        m_sc[...] = jnp.full_like(m_sc, -jnp.inf)
        l_sc[...] = jnp.zeros_like(l_sc)

    # MXU matmul: bf16 (or given matmul dtype) inputs, f32 accumulation.
    logits = jnp.dot(x_ref[...], w_ref[...],
                     preferred_element_type=jnp.float32)
    logits = logits + b_ref[...]  # bias already f32; broadcast over rows

    # Online (streaming) logsumexp update in f32.
    m_prev = m_sc[...]
    m_new = jnp.maximum(m_prev, jnp.max(logits, axis=-1, keepdims=True))
    l_sc[...] = (jnp.exp(m_prev - m_new) * l_sc[...]
                 + jnp.sum(jnp.exp(logits - m_new), axis=-1, keepdims=True))
    m_sc[...] = m_new

    # Stage raw logits for this vocab tile into the resident output block.
    tile_v = logits.shape[-1]
    col0 = pl.multiple_of(j * tile_v, tile_v)
    o_ref[:, pl.ds(col0, tile_v)] = logits.astype(o_ref.dtype)

    # After the last vocab tile: normalize the whole row block in place.
    @pl.when(j == num_v - 1)
    def _finalize():
        lse = m_sc[...] + jnp.log(l_sc[...])
        o_ref[...] = (o_ref[...].astype(jnp.float32) - lse).astype(o_ref.dtype)


def prediction_layer(x, weight, bias, *, tile_m=256, tile_v_max=2048,
                     matmul_dtype=jnp.bfloat16):
    """Fused Linear + log_softmax.

    x: (B, T, d_model); weight: (d_model, vocab) (== torch weight.T);
    bias: (vocab,).  Returns log-probabilities (B, T, vocab) matching
    torch.log_softmax(nn.Linear(d_model, vocab)(x), dim=-1).
    """
    B, T, D = x.shape
    Dw, V = weight.shape
    assert Dw == D, "weight must be (d_model, vocab)"
    M = B * T
    out_dtype = x.dtype

    # --- tile sizing -------------------------------------------------------
    tile_m_eff = min(_round_up(int(tile_m), 8), _round_up(M, 8))
    M_pad = _round_up(M, tile_m_eff)
    num_m = M_pad // tile_m_eff

    tile_v = min(_round_up(V, 128), _round_up(int(tile_v_max), 128))
    V_pad = _round_up(V, tile_v)
    num_v = V_pad // tile_v

    # --- pad & cast inputs (bf16 matmul inputs halve DMA / VMEM) -----------
    x2 = x.reshape(M, D).astype(matmul_dtype)
    if M_pad != M:
        x2 = jnp.pad(x2, ((0, M_pad - M), (0, 0)))
    w = weight.astype(matmul_dtype)
    b = bias.astype(jnp.float32)
    if V_pad != V:
        w = jnp.pad(w, ((0, 0), (0, V_pad - V)))
        # very negative bias -> padded columns contribute nothing to logsumexp
        b = jnp.pad(b, (0, V_pad - V), constant_values=-1e30)
    b2 = b.reshape(1, V_pad)

    # --- cost estimate & VMEM budget ---------------------------------------
    mm_bytes = jnp.dtype(matmul_dtype).itemsize
    out_bytes = jnp.dtype(out_dtype).itemsize
    cost = pl.CostEstimate(
        flops=2 * M * D * V,
        transcendentals=M * V + M,
        bytes_accessed=(M * D * mm_bytes + D * V * mm_bytes
                        + V * 4 + M * V * out_bytes),
    )
    vmem_needed = (
        2 * tile_m_eff * D * mm_bytes          # x tiles (double buffered)
        + 2 * D * tile_v * mm_bytes            # weight slabs (double buffered)
        + 2 * 8 * tile_v * 4                   # bias row (sublane padded)
        + 2 * tile_m_eff * V_pad * out_bytes   # resident output block
        + tile_m_eff * tile_v * 4              # f32 logits temporary
        + 2 * tile_m_eff * 4 * 2               # m/l scratch
    )
    vmem_limit = min(max(int(vmem_needed * 1.5), 32 * 1024 * 1024),
                     100 * 1024 * 1024)

    out2 = pl.pallas_call(
        _prediction_kernel,
        out_shape=jax.ShapeDtypeStruct((M_pad, V_pad), out_dtype),
        grid_spec=pltpu.PrefetchScalarGridSpec(
            num_scalar_prefetch=0,
            grid=(num_m, num_v),
            in_specs=[
                pl.BlockSpec((tile_m_eff, D), lambda i, j: (i, 0)),  # x rows
                pl.BlockSpec((D, tile_v), lambda i, j: (0, j)),      # W slab
                pl.BlockSpec((1, tile_v), lambda i, j: (0, j)),      # bias slab
            ],
            out_specs=pl.BlockSpec((tile_m_eff, V_pad), lambda i, j: (i, 0)),
            scratch_shapes=[
                pltpu.VMEM((tile_m_eff, 1), jnp.float32),  # running max
                pltpu.VMEM((tile_m_eff, 1), jnp.float32),  # running sum
            ],
        ),
        compiler_params=pltpu.CompilerParams(
            dimension_semantics=("parallel", "arbitrary"),
            vmem_limit_bytes=vmem_limit,
        ),
        cost_estimate=cost,
    )(x2, w, b2)

    return out2[:M, :V].reshape(B, T, V)


if __name__ == "__main__":
    # Small shapes consistent with the module's forward:
    # x: (batch_size, context_size, d_model)
    batch, context, d_model, vocab_size = 2, 8, 32, 128

    key = jax.random.PRNGKey(0)
    kx, kw, kb = jax.random.split(key, 3)

    x = jax.random.normal(kx, (batch, context, d_model), dtype=jnp.float32)
    # Deterministic synthetic parameters, stored as (d_model, vocab) == torch weight.T.
    weight = (jax.random.normal(kw, (d_model, vocab_size), dtype=jnp.float32)
              * (1.0 / jnp.sqrt(d_model)))
    bias = jax.random.normal(kb, (vocab_size,), dtype=jnp.float32) * 0.01

    out = prediction_layer(x, weight, bias)
    jax.block_until_ready(out)
    assert out.shape == (batch, context, vocab_size)

    # Reference with the same bf16 matmul-input rounding, f32 accumulation.
    xq = x.astype(jnp.bfloat16).astype(jnp.float32)
    wq = weight.astype(jnp.bfloat16).astype(jnp.float32)
    logits_ref = jnp.einsum("btd,dv->btv", xq, wq,
                            precision=jax.lax.Precision.HIGHEST) + bias
    ref = jax.nn.log_softmax(logits_ref, axis=-1)
    assert jnp.allclose(out, ref, atol=1e-3, rtol=1e-3), float(
        jnp.max(jnp.abs(out - ref)))

    # Also close to the pure-f32 reference within bf16-level tolerance.
    ref_f32 = jax.nn.log_softmax(
        jnp.einsum("btd,dv->btv", x, weight,
                   precision=jax.lax.Precision.HIGHEST) + bias, axis=-1)
    assert jnp.allclose(out, ref_f32, atol=5e-2, rtol=5e-2)

    print("KERNEL_OK")
</pallas_src>

<mosaic_0001>
module attributes {stable_mosaic.version = 11 : i64} {
  func.func @_prediction_kernel(%arg0: i32, %arg1: i32, %arg2: memref<16x32xbf16, #tpu.memory_space<vmem>>, %arg3: memref<32x128xbf16, #tpu.memory_space<vmem>>, %arg4: memref<1x128xf32, #tpu.memory_space<vmem>>, %arg5: memref<16x128xf32, #tpu.memory_space<vmem>>, %arg6: memref<16x1xf32, #tpu.memory_space<vmem>>, %arg7: memref<16x1xf32, #tpu.memory_space<vmem>>) attributes {dimension_semantics = [#tpu.dimension_semantics<parallel>, #tpu.dimension_semantics<arbitrary>], iteration_bounds = array<i64: 1, 1>, scalar_prefetch = 0 : i64, scratch_operands = 2 : i64, tpu.core_type = #tpu.core_type<tc>, window_params = [{transform_indices = @transform_0, window_bounds = array<i64: 16, 32>}, {transform_indices = @transform_1, window_bounds = array<i64: 32, 128>}, {transform_indices = @transform_2, window_bounds = array<i64: 1, 128>}, {transform_indices = @transform_3, window_bounds = array<i64: 16, 128>}]} {
    %c0_i32 = arith.constant 0 : i32
    %0 = arith.cmpi eq, %arg1, %c0_i32 : i32
    %1 = arith.extui %0 : i1 to i32
    %c0_i32_0 = arith.constant 0 : i32
    %2 = arith.cmpi ne, %1, %c0_i32_0 : i32
    scf.if %2 {
      %cst_19 = arith.constant 0xFF800000 : f32
      %32 = vector.broadcast %cst_19 : f32 to vector<16x1xf32>
      %c0_20 = arith.constant 0 : index
      %c0_21 = arith.constant 0 : index
      %33 = vector.load %arg6[%c0_20, %c0_21] : memref<16x1xf32, #tpu.memory_space<vmem>>, vector<16x1xf32>
      tpu.vector_store %arg6[%c0_20, %c0_21], %32 {strides = array<i32>} : memref<16x1xf32, #tpu.memory_space<vmem>>, vector<16x1xf32>,
      %cst_22 = arith.constant 0.000000e+00 : f32
      %34 = vector.broadcast %cst_22 : f32 to vector<16x1xf32>
      %c0_23 = arith.constant 0 : index
      %c0_24 = arith.constant 0 : index
      %35 = vector.load %arg7[%c0_23, %c0_24] : memref<16x1xf32, #tpu.memory_space<vmem>>, vector<16x1xf32>
      tpu.vector_store %arg7[%c0_23, %c0_24], %34 {strides = array<i32>} : memref<16x1xf32, #tpu.memory_space<vmem>>, vector<16x1xf32>,
    } else {
    }
    %c0 = arith.constant 0 : index
    %c0_1 = arith.constant 0 : index
    %3 = vector.load %arg2[%c0, %c0_1] : memref<16x32xbf16, #tpu.memory_space<vmem>>, vector<16x32xbf16>
    %c0_2 = arith.constant 0 : index
    %c0_3 = arith.constant 0 : index
    %4 = vector.load %arg3[%c0_2, %c0_3] : memref<32x128xbf16, #tpu.memory_space<vmem>>, vector<32x128xbf16>
    %cst = arith.constant dense<0.000000e+00> : vector<16x128xf32>
    %5 = tpu.matmul %3, %4, %cst {dimension_numbers = #tpu.dot_dimension_numbers<[1], [0], [0], [1], [0, 0, 1, 1], [], []>} : vector<16x32xbf16>, vector<32x128xbf16>, vector<16x128xf32> -> vector<16x128xf32>
    %c0_4 = arith.constant 0 : index
    %c0_5 = arith.constant 0 : index
    %6 = vector.load %arg4[%c0_4, %c0_5] : memref<1x128xf32, #tpu.memory_space<vmem>>, vector<1x128xf32>
    %7 = vector.broadcast %6 : vector<1x128xf32> to vector<16x128xf32>
    %8 = arith.addf %5, %7 : vector<16x128xf32>
    %c0_6 = arith.constant 0 : index
    %c0_7 = arith.constant 0 : index
    %9 = vector.load %arg6[%c0_6, %c0_7] : memref<16x1xf32, #tpu.memory_space<vmem>>, vector<16x1xf32>
    %cst_8 = arith.constant dense<0xFF800000> : vector<16xf32>
    %10 = vector.multi_reduction <maximumf>, %8, %cst_8 [1] : vector<16x128xf32> to vector<16xf32>
    %11 = vector.shape_cast %10 : vector<16xf32> to vector<16x1xf32>
    %12 = arith.maximumf %9, %11 : vector<16x1xf32>
    %13 = arith.subf %9, %12 : vector<16x1xf32>
    %14 = math.exp %13 : vector<16x1xf32>
    %c0_9 = arith.constant 0 : index
    %c0_10 = arith.constant 0 : index
    %15 = vector.load %arg7[%c0_9, %c0_10] : memref<16x1xf32, #tpu.memory_space<vmem>>, vector<16x1xf32>
    %16 = arith.mulf %14, %15 : vector<16x1xf32>
    %17 = vector.broadcast %12 : vector<16x1xf32> to vector<16x128xf32>
    %18 = arith.subf %8, %17 : vector<16x128xf32>
    %19 = math.exp %18 : vector<16x128xf32>
    %cst_11 = arith.constant dense<0.000000e+00> : vector<16xf32>
    %20 = vector.multi_reduction <add>, %19, %cst_11 [1] : vector<16x128xf32> to vector<16xf32>
    %21 = vector.shape_cast %20 : vector<16xf32> to vector<16x1xf32>
    %22 = arith.addf %16, %21 : vector<16x1xf32>
    %c0_12 = arith.constant 0 : index
    %c0_13 = arith.constant 0 : index
    %23 = vector.load %arg7[%c0_12, %c0_13] : memref<16x1xf32, #tpu.memory_space<vmem>>, vector<16x1xf32>
    tpu.vector_store %arg7[%c0_12, %c0_13], %22 {strides = array<i32>} : memref<16x1xf32, #tpu.memory_space<vmem>>, vector<16x1xf32>,
    %c0_14 = arith.constant 0 : index
    %c0_15 = arith.constant 0 : index
    %24 = vector.load %arg6[%c0_14, %c0_15] : memref<16x1xf32, #tpu.memory_space<vmem>>, vector<16x1xf32>
    tpu.vector_store %arg6[%c0_14, %c0_15], %12 {strides = array<i32>} : memref<16x1xf32, #tpu.memory_space<vmem>>, vector<16x1xf32>,
    %c128_i32 = arith.constant 128 : i32
    %25 = arith.muli %arg1, %c128_i32 : i32
    %26 = tpu.assume_multiple %25, 128 : i32
    %c0_16 = arith.constant 0 : index
    %27 = arith.index_cast %26 : i32 to index
    %28 = vector.load %arg5[%c0_16, %27] : memref<16x128xf32, #tpu.memory_space<vmem>>, vector<16x128xf32>
    tpu.vector_store %arg5[%c0_16, %27], %8 {strides = array<i32>} : memref<16x128xf32, #tpu.memory_space<vmem>>, vector<16x128xf32>,
    %c0_i32_17 = arith.constant 0 : i32
    %29 = arith.cmpi eq, %arg1, %c0_i32_17 : i32
    %30 = arith.extui %29 : i1 to i32
    %c0_i32_18 = arith.constant 0 : i32
    %31 = arith.cmpi ne, %30, %c0_i32_18 : i32
    scf.if %31 {
      %c0_19 = arith.constant 0 : index
      %c0_20 = arith.constant 0 : index
      %32 = vector.load %arg6[%c0_19, %c0_20] : memref<16x1xf32, #tpu.memory_space<vmem>>, vector<16x1xf32>
      %c0_21 = arith.constant 0 : index
      %c0_22 = arith.constant 0 : index
      %33 = vector.load %arg7[%c0_21, %c0_22] : memref<16x1xf32, #tpu.memory_space<vmem>>, vector<16x1xf32>
      %34 = math.log %33 : vector<16x1xf32>
      %35 = arith.addf %32, %34 : vector<16x1xf32>
      %c0_23 = arith.constant 0 : index
      %c0_24 = arith.constant 0 : index
      %36 = vector.load %arg5[%c0_23, %c0_24] : memref<16x128xf32, #tpu.memory_space<vmem>>, vector<16x128xf32>
      %37 = vector.broadcast %35 : vector<16x1xf32> to vector<16x128xf32>
      %38 = arith.subf %36, %37 : vector<16x128xf32>
      %c0_25 = arith.constant 0 : index
      %c0_26 = arith.constant 0 : index
      %39 = vector.load %arg5[%c0_25, %c0_26] : memref<16x128xf32, #tpu.memory_space<vmem>>, vector<16x128xf32>
      tpu.vector_store %arg5[%c0_25, %c0_26], %38 {strides = array<i32>} : memref<16x128xf32, #tpu.memory_space<vmem>>, vector<16x128xf32>,
    } else {
    }
    return
  }
  func.func @transform_0(%arg0: i32, %arg1: i32) -> (i32, i32) {
    %c0_i32 = arith.constant 0 : i32
    %c0_i32_0 = arith.constant 0 : i32
    return %arg0, %c0_i32 : i32, i32
  }
  func.func @transform_1(%arg0: i32, %arg1: i32) -> (i32, i32) {
    %c0_i32 = arith.constant 0 : i32
    %c0_i32_0 = arith.constant 0 : i32
    return %c0_i32, %arg1 : i32, i32
  }
  func.func @transform_2(%arg0: i32, %arg1: i32) -> (i32, i32) {
    %c0_i32 = arith.constant 0 : i32
    %c0_i32_0 = arith.constant 0 : i32
    return %c0_i32, %arg1 : i32, i32
  }
  func.func @transform_3(%arg0: i32, %arg1: i32) -> (i32, i32) {
    %c0_i32 = arith.constant 0 : i32
    %c0_i32_0 = arith.constant 0 : i32
    return %arg0, %c0_i32 : i32, i32
  }
}

</mosaic_0001>

<llo_original>
// kernel: tpu_custom_call.1
$region0: #{tpu_custom_call.1}
  #allocation0 [shape = 'u32[]', space=smem, size = 0x4, offset = 0x4, fixed_abs, tag = 'smem constant byte address 0x4 - core index']
  #allocation1 [shape = 'u32[144,128]{1,0:T(1,128)}', space=vmem, size = 0x12000, scoped, tag = 'internal scratch']
  #allocation2 [shape = 'f32[16,1]{1,0:T(8,128)}', space=vmem, size = 0x2000, scoped, tag = 'scratch operand']
  #allocation3 [shape = 'f32[16,1]{1,0:T(8,128)}', space=vmem, size = 0x2000, scoped, tag = 'scratch operand']
  %s0 = inlined_call_operand.hbm [shape: bf16[16,32], index: 0, kind: input, shape index: {}]
  %s1 = inlined_call_operand.hbm [shape: bf16[32,128], index: 1, kind: input, shape index: {}]
  %s2 = inlined_call_operand.vmem [shape: f32[1,128], index: 2, kind: input, shape index: {}]
  %s3 = inlined_call_operand.hbm [shape: f32[16,128], index: 3, kind: output, shape index: {}]
  %s4 = sld [smem:[#allocation0]]
  $region38: #{tpu_custom_call.1} parent=0
    _
  %s6 = ssub.s32 1, %s4
  %s7 = scalar_select 0, %s6, %s4
  $region1: #{tpu_custom_call.1} parent=0
    #allocation4 [shape = 'u8[4096]{0}', space=vmem, size = 0x1000, scoped, tag = 'input window, operand 0, single buffered']
    #allocation5 [shape = 's32[1]{0}', space=sflag, size = 0x4, scoped, tag = 'scoped memory for tpu_custom_call.1']
    #allocation6 [shape = 's32[1]{0}', space=sflag, size = 0x4, scoped, tag = 'scoped memory for tpu_custom_call.1']
    #allocation7 [shape = 'u8[8192]{0}', space=vmem, size = 0x2000, scoped, tag = 'input window, operand 1, single buffered']
    #allocation8 [shape = 's32[1]{0}', space=sflag, size = 0x4, scoped, tag = 'scoped memory for tpu_custom_call.1']
    #allocation9 [shape = 'u8[8192]{0}', space=vmem, size = 0x2000, scoped, tag = 'output window, operand 0, single buffered']
    %8 = vsyncpa [#allocation5], 0
    %9 = vsyncpa [#allocation8], 0
    %10 = vsyncpa [#allocation6], 0
    // Predicated region
    $region2: #{tpu_custom_call.1} parent=1 // pred_check
      _
    $region3: #{tpu_custom_call.1} parent=1 // pred_check_branch
      %12 = sbr.rel (0) target = $region5
    $region4: #{tpu_custom_call.1} parent=1 // pred_region
      %s14 = ssub.s32 128, 128
      %15 = vsyncadd [#allocation5], %s14
      %s16 = sshll.u32 [#allocation4], 4
      %s17 = int_to_ptr.vmem [resolvable:$true] %s16
      %22 = dma.hbm_to_vmem [thread:$0]  %s0, 128, %s17, [#allocation5], 64, 64, 4
    $region5: #{tpu_custom_call.1} parent=1 // pred_fallthru
      _
    // Predicated region
    $region6: #{tpu_custom_call.1} parent=1 // pred_check
      _
    $region7: #{tpu_custom_call.1} parent=1 // pred_check_branch
      %24 = sbr.rel (0) target = $region9
    $region8: #{tpu_custom_call.1} parent=1 // pred_region
      %s26 = ssub.s32 256, 256
      %27 = vsyncadd [#allocation8], %s26
      %s28 = sshll.u32 [#allocation7], 4
      %s29 = int_to_ptr.vmem [resolvable:$true] %s28
      %34 = dma.hbm_to_vmem [thread:$0]  %s1, 256, %s29, [#allocation8], 64, 64, 4
    $region9: #{tpu_custom_call.1} parent=1 // pred_fallthru
      _
    // Predicated region
    $region10: #{tpu_custom_call.1} parent=1 // pred_check
      _
    $region11: #{tpu_custom_call.1} parent=1 // pred_check_branch
      %36 = sbr.rel (0) target = $region13
    $region12: #{tpu_custom_call.1} parent=1 // pred_region
      _
    $region13: #{tpu_custom_call.1} parent=1 // pred_fallthru
      _
    // Predicated region
    $region14: #{tpu_custom_call.1} parent=1 // pred_check
      _
    $region15: #{tpu_custom_call.1} parent=1 // pred_check_branch
      %38 = sbr.rel (0) target = $region17
    $region16: #{tpu_custom_call.1} parent=1 // pred_region
      %39 = dma.done [#allocation5], 128
    $region17: #{tpu_custom_call.1} parent=1 // pred_fallthru
      _
    // Predicated region
    $region18: #{tpu_custom_call.1} parent=1 // pred_check
      _
    $region19: #{tpu_custom_call.1} parent=1 // pred_check_branch
      %41 = sbr.rel (0) target = $region21
    $region20: #{tpu_custom_call.1} parent=1 // pred_region
      %42 = dma.done [#allocation8], 256
    $region21: #{tpu_custom_call.1} parent=1 // pred_fallthru
      _
    %p44 = scmp.eq.s32.totalorder 0, 0
    // Predicated region
    $region22: #{tpu_custom_call.1} parent=1 // pred_check
      %p45 = pneg %p44
    $region23: #{tpu_custom_call.1} parent=1 // pred_check_branch
      %47 = sbr.rel (%p45) target = $region25
    $region24: #{tpu_custom_call.1} parent=1 // pred_region
      %vm48 = vcmask 7168
      %49 = vst.msk [vmem:[#allocation2] sm:$0xff] %vm48, -inf
      %50 = vst.msk [vmem:[#allocation2 + $0x8] sm:$0xff] %vm48, -inf
      %51 = vst.msk [vmem:[#allocation3] sm:$0xff] %vm48, 0.0
      %52 = vst.msk [vmem:[#allocation3 + $0x8] sm:$0xff] %vm48, 0.0
    $region25: #{tpu_custom_call.1} parent=1 // pred_fallthru
      _
    %v53 = vld [vmem:[#allocation4] sm:$0xf]
    %v54 = vld [vmem:[#allocation4 + $0x4] sm:$0xf]
    %v55 = vld [vmem:[#allocation7] sm:$0xf]
    %v56 = vld [vmem:[#allocation7 + $0x4] sm:$0xf]
    %v57 = vld [vmem:[#allocation7 + $0x8] sm:$0xf]
    %v58 = vld [vmem:[#allocation7 + $0xc] sm:$0xf]
    %v59 = vld [vmem:[%s2] sm:$0x1]
    %v61 = vlaneseq
    %v62 = vshrl.u32 %v61, 7
    %v63 = vsub.s32 0, %v62
    %v64 = vrot.slane %v59, %v63
    %v68 = vunpack.c.l.b16 %v53
    %v69 = vunpack.c.l.b16 %v54
    %v70 = vpack.c.b16 %v69, %v68
    %v75 = vunpack.c.l.b16 %v55
    %v76 = vunpack.c.l.b16 %v56
    %v77 = vunpack.c.l.b16 %v57
    %v78 = vunpack.c.l.b16 %v58
    %v79 = vpack.c.b16 %v76, %v75
    %v80 = vpack.c.b16 %v78, %v77
    %vm83 = vcmask 261120
    %v85 = vsel %vm83, %v70, 0
    %87 = vmatprep.subr.bf16.mxu0 0
    %88 = vmatpush1.bf16.msra.mxu0 %v79
    %89 = vmatprep.subr.bf16.mxu0 0
    %90 = vmatpush1.bf16.msra.mxu0 %v80
    %91 = vmatprep.subr.bf16.mxu0 0
    %92 = vmatpush1.bf16.msra.mxu0 0
    %93 = vmatprep.subr.bf16.mxu0 0
    %94 = vmatpush1.bf16.msra.mxu0 0
    %95 = vmatprep.subr.bf16.mxu0 0
    %96 = vmatpush1.bf16.msra.mxu0 0
    %97 = vmatprep.subr.bf16.mxu0 0
    %98 = vmatpush1.bf16.msra.mxu0 0
    %99 = vmatprep.subr.bf16.mxu0 0
    %100 = vmatpush1.bf16.msra.mxu0 0
    %101 = vmatprep.subr.bf16.mxu0 0
    %102 = vmatpush1.bf16.msra.mxu0 0
    %103 = vmatprep.subr.bf16.mxu0 0
    %104 = vmatpush1.bf16.msra.mxu0 0
    %105 = vmatprep.subr.bf16.mxu0 0
    %106 = vmatpush1.bf16.msra.mxu0 0
    %107 = vmatprep.subr.bf16.mxu0 0
    %108 = vmatpush1.bf16.msra.mxu0 0
    %109 = vmatprep.subr.bf16.mxu0 0
    %110 = vmatpush1.bf16.msra.mxu0 0
    %111 = vmatprep.subr.bf16.mxu0 0
    %112 = vmatpush1.bf16.msra.mxu0 0
    %113 = vmatprep.subr.bf16.mxu0 0
    %114 = vmatpush1.bf16.msra.mxu0 0
    %115 = vmatprep.subr.bf16.mxu0 0
    %116 = vmatpush1.bf16.msra.mxu0 0
    %117 = vmatprep.subr.bf16.mxu0 0
    %118 = vmatpush1.bf16.msra.mxu0 0
    %119 = vmatprep.mubr.bf16.mxu0 0
    %120 = vmatmul.mubr.bf16.gmra.mrb[0].mxu0 %v85
    %v121 = vpop.f32.mrb[0].mxu0
    %v122 = vadd.f32 %v64, %v121
    %v123 = vpop.f32.mrb[0].mxu0
    %v124 = vpop.f32.mrb[0].mxu0
    %v125 = vadd.f32 %v64, %v124
    %v126 = vpop.f32.mrb[0].mxu0
    %127 = vdwg.mxu0
    %v128 = vld [vmem:[#allocation2] sm:$0xff]
    %v129 = vld [vmem:[#allocation2 + $0x8] sm:$0xff]
    %130 = vmax.xlane.f32.xlu0 %v122
    %v131 = vpop.xlane.xlu0 %130
    %132 = vmax.xlane.f32.xlu0 %v125
    %v133 = vpop.xlane.xlu0 %132
    %v134 = vmax.f32 %v128, %v131
    %v135 = vmax.f32 %v129, %v133
    %v136 = vsub.f32 %v128, %v134
    %v137 = vsub.f32 %v129, %v135
    %v138 = vmul.f32 %v136, 1.442695
    %v139 = vpow.pop %v138
    %v140 = vmul.f32 %v137, 1.442695
    %v141 = vpow.pop %v140
    %v142 = vld [vmem:[#allocation3] sm:$0xff]
    %v143 = vld [vmem:[#allocation3 + $0x8] sm:$0xff]
    %v144 = vmul.f32 %v139, %v142
    %v145 = vmul.f32 %v141, %v143
    %147 = vset.pattern.permute.xlu0 0
    %148 = vperm.xlu0 %147, %v134
    %v149 = vpop.permute.xlu0 %148
    %152 = vset.pattern.permute.xlu0 0
    %153 = vperm.xlu0 %152, %v135
    %v154 = vpop.permute.xlu0 %153
    %v156 = vsub.f32 %v122, %v149
    %v157 = vsub.f32 %v125, %v154
    %v158 = vmul.f32 %v156, 1.442695
    %v159 = vpow.pop %v158
    %v160 = vmul.f32 %v157, 1.442695
    %v161 = vpow.pop %v160
    %162 = vadd.xlane.f32.xlu0 %v159
    %v163 = vpop.xlane.xlu0 %162
    %164 = vadd.xlane.f32.xlu0 %v161
    %v165 = vpop.xlane.xlu0 %164
    %v166 = vadd.f32 %v144, %v163
    %v167 = vadd.f32 %v145, %v165
    %vm168 = vcmask 7168
    %169 = vst.msk [vmem:[#allocation3] sm:$0xff] %vm168, %v166
    %170 = vst.msk [vmem:[#allocation3 + $0x8] sm:$0xff] %vm168, %v167
    %171 = vst.msk [vmem:[#allocation2] sm:$0xff] %vm168, %v134
    %172 = vst.msk [vmem:[#allocation2 + $0x8] sm:$0xff] %vm168, %v135
    %s173 = smul.u32 0, 128
    %s174 = sshra.s32 %s173, 7
    %s175 = sand.u32 %s173, 127
    %s176 = scalar_lea.vmem [#allocation9], %s174
    %177 = vst [vmem:[%s176] sm:$0xff] %v122
    %178 = vst [vmem:[%s176 + $0x8] sm:$0xff] %v125
    // Predicated region
    $region26: #{tpu_custom_call.1} parent=1 // pred_check
      %p179 = pneg %p44
    $region27: #{tpu_custom_call.1} parent=1 // pred_check_branch
      %181 = sbr.rel (%p179) target = $region29
    $region28: #{tpu_custom_call.1} parent=1 // pred_region
      %v182 = vld [vmem:[#allocation2] sm:$0xff]
      %v183 = vld [vmem:[#allocation2 + $0x8] sm:$0xff]
      %v184 = vld [vmem:[#allocation3] sm:$0xff]
      %v185 = vld [vmem:[#allocation3 + $0x8] sm:$0xff]
      %v186 = vlog2.pop %v184
      %v187 = vmul.f32 %v186, 0.6931472
      %v188 = vlog2.pop %v185
      %v189 = vmul.f32 %v188, 0.6931472
      %v190 = vadd.f32 %v182, %v187
      %v191 = vadd.f32 %v183, %v189
      %v192 = vld [vmem:[#allocation9] sm:$0xff]
      %v193 = vld [vmem:[#allocation9 + $0x8] sm:$0xff]
      %195 = vset.pattern.permute.xlu0 0
      %196 = vperm.xlu0 %195, %v190
      %v197 = vpop.permute.xlu0 %196
      %200 = vset.pattern.permute.xlu0 0
      %201 = vperm.xlu0 %200, %v191
      %v202 = vpop.permute.xlu0 %201
      %v204 = vsub.f32 %v192, %v197
      %v205 = vsub.f32 %v193, %v202
      %206 = vst [vmem:[#allocation9] sm:$0xff] %v204
      %207 = vst [vmem:[#allocation9 + $0x8] sm:$0xff] %v205
    $region29: #{tpu_custom_call.1} parent=1 // pred_fallthru
      _
    // Predicated region
    $region30: #{tpu_custom_call.1} parent=1 // pred_check
      _
    $region31: #{tpu_custom_call.1} parent=1 // pred_check_branch
      %209 = sbr.rel (0) target = $region33
    $region32: #{tpu_custom_call.1} parent=1 // pred_region
      %s211 = ssub.s32 256, 256
      %212 = vsyncadd [#allocation6], %s211
      %s213 = sshll.u32 [#allocation9], 4
      %s214 = int_to_ptr.vmem [resolvable:$true] %s213
      %219 = dma.vmem_to_hbm [thread:$0]  %s214, 256, %s3, [#allocation6], 128, 128, 8
    $region33: #{tpu_custom_call.1} parent=1 // pred_fallthru
      _
    // Predicated region
    $region34: #{tpu_custom_call.1} parent=1 // pred_check
      _
    $region35: #{tpu_custom_call.1} parent=1 // pred_check_branch
      %221 = sbr.rel (0) target = $region37
    $region36: #{tpu_custom_call.1} parent=1 // pred_region
      %222 = dma.done [#allocation6], 256
    $region37: #{tpu_custom_call.1} parent=1 // pred_fallthru
      _
    %223 = vsyncpa [#allocation5], 1
    %224 = vsyncpa [#allocation8], 1
    %225 = vsyncpa [#allocation6], 1

</llo_original>
